<compile_context>
chip_gen: v7x
topology: tpu7x:2x2x1
jax: 0.10.0
libtpu: 0.0.40
codegen_flags: <defaults>
</compile_context>

<pallas_src>
import jax
import jax.numpy as jnp
from jax.experimental import pallas as pl
from jax.experimental.pallas import tpu as pltpu

_LANES = 128                        # vreg lane width
_TILE_BYTES = 2 * 1024 * 1024       # per-buffer VMEM budget (~8 MiB total w/ 2x double-buffering)
_SUBLANES_BY_ITEMSIZE = {4: 8, 2: 16, 1: 32}


def _round_up(v, m):
    return ((v + m - 1) // m) * m


def _pick_tile_rows(rows, sublanes, max_tile_rows):
    """Pick a sublane-aligned row tile; prefer >=2 grid steps (v7x megacore)."""
    if rows > max_tile_rows:
        return max_tile_rows                       # multiple of `sublanes`
    if rows >= 2 * sublanes:
        half = _round_up(-(-rows // 2), sublanes)  # ceil(rows/2) -> sublane mult
        return min(half, max_tile_rows)            # ~2 steps; last may be partial
    return rows                                    # tiny: single full-extent block


def _affine_kernel(w_ref, b_ref, x_ref, o_ref):
    # w_ref / b_ref: (1,) SMEM scalars.  x_ref / o_ref: (tile_r, 128) VMEM tiles.
    # Pure VPU elementwise: y = w * x + b, cast back to the output dtype.
    w = w_ref[0]
    b = b_ref[0]
    o_ref[...] = (x_ref[...] * w + b).astype(o_ref.dtype)


def _affine_call(x, w_scalar, b_scalar):
    """y = w_scalar * x + b_scalar, lane-dense + tiled in Pallas."""
    orig_shape = x.shape
    dtype = x.dtype
    n = x.size
    itemsize = jnp.dtype(dtype).itemsize
    sublanes = _SUBLANES_BY_ITEMSIZE.get(itemsize, 8)

    # Tiny inputs: pallas_call launch + packing overhead would dominate; let
    # XLA fuse the trivial affine directly.
    if n < sublanes * _LANES:
        return (x * w_scalar[0] + b_scalar[0]).astype(dtype)

    rows = pl.cdiv(n, _LANES)
    padded_n = rows * _LANES

    x_flat = jnp.ravel(x)
    if padded_n != n:
        # TODO(synk): the unaligned tail still costs one pad of x and one slice
        # of y; an in-kernel masked tail store would remove both if it matters.
        x_flat = jnp.pad(x_flat, (0, padded_n - n))
    x2d = x_flat.reshape(rows, _LANES)      # row-major reshape: no copy

    max_tile_rows = _TILE_BYTES // (_LANES * itemsize)   # 4096 rows for f32
    tile_r = _pick_tile_rows(rows, sublanes, max_tile_rows)
    num_tiles = pl.cdiv(rows, tile_r)       # last block may be partial (masked)

    out2d = pl.pallas_call(
        _affine_kernel,
        out_shape=jax.ShapeDtypeStruct((rows, _LANES), dtype),
        grid=(num_tiles,),
        in_specs=[
            pl.BlockSpec(memory_space=pltpu.MemorySpace.SMEM),   # weight (1,)
            pl.BlockSpec(memory_space=pltpu.MemorySpace.SMEM),   # bias   (1,)
            pl.BlockSpec((tile_r, _LANES), lambda i: (i, 0)),    # x tile
        ],
        out_specs=pl.BlockSpec((tile_r, _LANES), lambda i: (i, 0)),
        compiler_params=pltpu.CompilerParams(
            dimension_semantics=("parallel",),
        ),
        cost_estimate=pl.CostEstimate(
            flops=2 * padded_n,
            transcendentals=0,
            bytes_accessed=2 * padded_n * itemsize,
        ),
    )(w_scalar, b_scalar, x2d)

    if padded_n == n:
        return out2d.reshape(orig_shape)                 # zero-copy fast path
    return out2d.reshape(-1)[:n].reshape(orig_shape)


class LinearRegressionModelPallas:
    VERSION1 = "v1"
    VERSION2 = "v2"

    def __init__(self, model_version=VERSION1, key=None):
        if key is None:
            key = jax.random.PRNGKey(42)
        self._model_version = model_version
        k1, k2 = jax.random.split(key)
        if model_version == self.VERSION1:
            # nn.Parameter(torch.randn(1)) x2 — deterministic synthetic init.
            self.weights = jax.random.normal(k1, (1,), dtype=jnp.float32)
            self.bias = jax.random.normal(k2, (1,), dtype=jnp.float32)
        elif model_version == self.VERSION2:
            # nn.Linear(1, 1): W shape (1, 1), b shape (1,).
            bound = 1.0
            self.W = jax.random.uniform(k1, (1, 1), jnp.float32, -bound, bound)
            self.b = jax.random.uniform(k2, (1,), jnp.float32, -bound, bound)
        else:
            raise ValueError(f"unknown model version: {model_version}")

    def __call__(self, x):
        if self._model_version == self.VERSION1:
            return _affine_call(x, self.weights, self.bias)
        # VERSION2: x @ W.T + b with a 1x1 W is the same scalar affine;
        # intentionally kept on the VPU (a 1x1 MXU pass would be waste).
        return _affine_call(x, self.W.reshape(1), self.b)


if __name__ == "__main__":
    key = jax.random.PRNGKey(0)
    kx1, kx2, kx3 = jax.random.split(key, 3)

    m1 = LinearRegressionModelPallas(LinearRegressionModelPallas.VERSION1)
    m2 = LinearRegressionModelPallas(LinearRegressionModelPallas.VERSION2)

    # (8, 1): tiny-input bypass path (plain fused XLA affine).
    x_small = jax.random.normal(kx1, (8, 1), dtype=jnp.float32)
    y_small = jax.block_until_ready(m1(x_small))
    assert y_small.shape == x_small.shape, "VERSION1 small shape mismatch"
    assert jnp.allclose(y_small, m1.weights * x_small + m1.bias, atol=1e-5), \
        "VERSION1 small mismatch"

    # (1024, 1): lane-aligned zero-copy Pallas path (rows=8, single block).
    x_mid = jax.random.normal(kx2, (1024, 1), dtype=jnp.float32)
    y_mid = jax.block_until_ready(m1(x_mid))
    assert y_mid.shape == x_mid.shape, "VERSION1 mid shape mismatch"
    assert jnp.allclose(y_mid, m1.weights * x_mid + m1.bias, atol=1e-5), \
        "VERSION1 mid mismatch"

    # VERSION2 on the same aligned input.
    y2 = jax.block_until_ready(m2(x_mid))
    assert y2.shape == x_mid.shape, "VERSION2 shape mismatch"
    assert jnp.allclose(y2, x_mid @ m2.W.T + m2.b, atol=1e-5), "VERSION2 mismatch"

    # (3001, 1): unaligned tail -> pad-to-128 path, 2-step grid w/ partial block.
    x_odd = jax.random.normal(kx3, (3001, 1), dtype=jnp.float32)
    y_odd = jax.block_until_ready(m1(x_odd))
    assert y_odd.shape == x_odd.shape, "unaligned shape mismatch"
    assert jnp.allclose(y_odd, m1.weights * x_odd + m1.bias, atol=1e-5), \
        "unaligned mismatch"

    print("KERNEL_OK")
</pallas_src>

<mosaic_0001>
module attributes {stable_mosaic.version = 11 : i64} {
  func.func @_affine_kernel(%arg0: i32, %arg1: memref<1xf32, #tpu.memory_space<smem>>, %arg2: memref<1xf32, #tpu.memory_space<smem>>, %arg3: memref<8x128xf32, #tpu.memory_space<vmem>>, %arg4: memref<8x128xf32, #tpu.memory_space<vmem>>) attributes {dimension_semantics = [#tpu.dimension_semantics<parallel>], iteration_bounds = array<i64: 1>, scalar_prefetch = 0 : i64, scratch_operands = 0 : i64, tpu.core_type = #tpu.core_type<tc>, window_params = [{transform_indices = @transform_0, window_bounds = array<i64: 1>}, {transform_indices = @transform_1, window_bounds = array<i64: 1>}, {transform_indices = @transform_2, window_bounds = array<i64: 8, 128>}, {transform_indices = @transform_3, window_bounds = array<i64: 8, 128>}]} {
    %c0 = arith.constant 0 : index
    %0 = memref.load %arg1[%c0] : memref<1xf32, #tpu.memory_space<smem>>
    %c0_0 = arith.constant 0 : index
    %1 = memref.load %arg2[%c0_0] : memref<1xf32, #tpu.memory_space<smem>>
    %c0_1 = arith.constant 0 : index
    %c0_2 = arith.constant 0 : index
    %2 = vector.load %arg3[%c0_1, %c0_2] : memref<8x128xf32, #tpu.memory_space<vmem>>, vector<8x128xf32>
    %3 = vector.broadcast %0 : f32 to vector<8x128xf32>
    %4 = arith.mulf %2, %3 : vector<8x128xf32>
    %5 = vector.broadcast %1 : f32 to vector<8x128xf32>
    %6 = arith.addf %4, %5 : vector<8x128xf32>
    %c0_3 = arith.constant 0 : index
    %c0_4 = arith.constant 0 : index
    %7 = vector.load %arg4[%c0_3, %c0_4] : memref<8x128xf32, #tpu.memory_space<vmem>>, vector<8x128xf32>
    tpu.vector_store %arg4[%c0_3, %c0_4], %6 {strides = array<i32>} : memref<8x128xf32, #tpu.memory_space<vmem>>, vector<8x128xf32>,
    return
  }
  func.func @transform_0(%arg0: i32) -> i32 {
    %c0_i32 = arith.constant 0 : i32
    %c0_i32_0 = arith.constant 0 : i32
    return %c0_i32 : i32
  }
  func.func @transform_1(%arg0: i32) -> i32 {
    %c0_i32 = arith.constant 0 : i32
    %c0_i32_0 = arith.constant 0 : i32
    return %c0_i32 : i32
  }
  func.func @transform_2(%arg0: i32) -> (i32, i32) {
    %c0_i32 = arith.constant 0 : i32
    %c0_i32_0 = arith.constant 0 : i32
    return %arg0, %c0_i32 : i32, i32
  }
  func.func @transform_3(%arg0: i32) -> (i32, i32) {
    %c0_i32 = arith.constant 0 : i32
    %c0_i32_0 = arith.constant 0 : i32
    return %arg0, %c0_i32 : i32, i32
  }
}

</mosaic_0001>

<llo_original>
// kernel: tpu_custom_call.1
$region0: #{tpu_custom_call.1}
  #allocation0 [shape = 'u32[]', space=smem, size = 0x4, offset = 0x4, fixed_abs, tag = 'smem constant byte address 0x4 - core index']
  #allocation1 [shape = 'u32[144,128]{1,0:T(1,128)}', space=vmem, size = 0x12000, scoped, tag = 'internal scratch']
  #allocation2 [shape = 'f32[1]{0:T(128)S(6)}', space=smem, size = 0x200, scoped, tag = 'scoped memory for tpu_custom_call.1']
  #allocation3 [shape = 'f32[1]{0:T(128)S(6)}', space=smem, size = 0x200, scoped, tag = 'scoped memory for tpu_custom_call.1']
  %s0 = inlined_call_operand.<no memory space> [shape: f32[1], index: 0, kind: input, shape index: {}]
  %s1 = inlined_call_operand.<no memory space> [shape: f32[1], index: 1, kind: input, shape index: {}]
  %s2 = inlined_call_operand.hbm [shape: f32[8,128], index: 2, kind: input, shape index: {}]
  %s3 = inlined_call_operand.hbm [shape: f32[8,128], index: 3, kind: output, shape index: {}]
  %s4 = sld [smem:[#allocation0]]
  $region26: #{tpu_custom_call.1} parent=0
    _
  %s6 = ssub.s32 1, %s4
  %s7 = scalar_select 0, %s6, %s4
  %8 = sst [smem:[#allocation2]] %s0
  %9 = sst [smem:[#allocation3]] %s1
  $region1: #{tpu_custom_call.1} parent=0
    #allocation4 [shape = 'u8[4096]{0}', space=vmem, size = 0x1000, scoped, tag = 'input window, operand 2, single buffered']
    #allocation5 [shape = 's32[1]{0}', space=sflag, size = 0x4, scoped, tag = 'scoped memory for tpu_custom_call.1']
    #allocation6 [shape = 's32[1]{0}', space=sflag, size = 0x4, scoped, tag = 'scoped memory for tpu_custom_call.1']
    #allocation7 [shape = 'u8[4096]{0}', space=vmem, size = 0x1000, scoped, tag = 'output window, operand 0, single buffered']
    %10 = vsyncpa [#allocation5], 0
    %11 = vsyncpa [#allocation6], 0
    // Predicated region
    $region2: #{tpu_custom_call.1} parent=1 // pred_check
      _
    $region3: #{tpu_custom_call.1} parent=1 // pred_check_branch
      %13 = sbr.rel (0) target = $region5
    $region4: #{tpu_custom_call.1} parent=1 // pred_region
      _
    $region5: #{tpu_custom_call.1} parent=1 // pred_fallthru
      _
    // Predicated region
    $region6: #{tpu_custom_call.1} parent=1 // pred_check
      _
    $region7: #{tpu_custom_call.1} parent=1 // pred_check_branch
      %15 = sbr.rel (0) target = $region9
    $region8: #{tpu_custom_call.1} parent=1 // pred_region
      _
    $region9: #{tpu_custom_call.1} parent=1 // pred_fallthru
      _
    // Predicated region
    $region10: #{tpu_custom_call.1} parent=1 // pred_check
      _
    $region11: #{tpu_custom_call.1} parent=1 // pred_check_branch
      %17 = sbr.rel (0) target = $region13
    $region12: #{tpu_custom_call.1} parent=1 // pred_region
      %s19 = ssub.s32 128, 128
      %20 = vsyncadd [#allocation5], %s19
      %s22 = sshll.u32 [#allocation4], 4
      %s23 = int_to_ptr.vmem [resolvable:$true] %s22
      %25 = dma.hbm_to_vmem [thread:$0]  %s2, 128, %s23, [#allocation5]
    $region13: #{tpu_custom_call.1} parent=1 // pred_fallthru
      _
    // Predicated region
    $region14: #{tpu_custom_call.1} parent=1 // pred_check
      _
    $region15: #{tpu_custom_call.1} parent=1 // pred_check_branch
      %27 = sbr.rel (0) target = $region17
    $region16: #{tpu_custom_call.1} parent=1 // pred_region
      %28 = dma.done [#allocation5], 128
    $region17: #{tpu_custom_call.1} parent=1 // pred_fallthru
      _
    %s29 = sld [smem:[#allocation2]]
    %s30 = sld [smem:[#allocation3]]
    %v31 = vld [vmem:[#allocation4] sm:$0xff]
    %v32 = vstv %s29
    %v33 = vmul.f32 %v31, %v32
    %v34 = vstv %s30
    %v35 = vadd.f32 %v33, %v34
    %36 = vst [vmem:[#allocation7] sm:$0xff] %v35
    // Predicated region
    $region18: #{tpu_custom_call.1} parent=1 // pred_check
      _
    $region19: #{tpu_custom_call.1} parent=1 // pred_check_branch
      %38 = sbr.rel (0) target = $region21
    $region20: #{tpu_custom_call.1} parent=1 // pred_region
      %s40 = ssub.s32 128, 128
      %41 = vsyncadd [#allocation6], %s40
      %s43 = sshll.u32 [#allocation7], 4
      %s44 = int_to_ptr.vmem [resolvable:$true] %s43
      %46 = dma.vmem_to_hbm [thread:$0]  %s44, 128, %s3, [#allocation6]
    $region21: #{tpu_custom_call.1} parent=1 // pred_fallthru
      _
    // Predicated region
    $region22: #{tpu_custom_call.1} parent=1 // pred_check
      _
    $region23: #{tpu_custom_call.1} parent=1 // pred_check_branch
      %48 = sbr.rel (0) target = $region25
    $region24: #{tpu_custom_call.1} parent=1 // pred_region
      %49 = dma.done [#allocation6], 128
    $region25: #{tpu_custom_call.1} parent=1 // pred_fallthru
      _
    %50 = vsyncpa [#allocation5], 1
    %51 = vsyncpa [#allocation6], 1

</llo_original>
